<compile_context>
chip_gen: v7x
topology: tpu7x:2x2x1
jax: 0.10.0
libtpu: 0.0.40
codegen_flags: <defaults>
</compile_context>

<pallas_src>
import functools

import jax
import jax.numpy as jnp
from jax import lax
from jax.experimental import pallas as pl
from jax.experimental.pallas import tpu as pltpu


def _round_up(x, m):
    return (x + m - 1) // m * m


def header_kernel(x_ref, len_ref, w_ref, b_ref, o_ref, acc_ref):
    # x_ref:   (Bt, Tt, H)  input dtype (f32 / bf16)
    # len_ref: (Bt, 1)      int32
    # w_ref:   (1, H)       float32   (Linear weight row)
    # b_ref:   (1, 1)       float32   (Linear bias)
    # o_ref:   (1, Bt)      float32   (lane-dense output tile)
    # acc_ref: (Bt, H)      float32   VMEM scratch accumulator
    k = pl.program_id(1)
    bt, tt, _ = x_ref.shape

    @pl.when(k == 0)
    def _init():
        acc_ref[...] = jnp.zeros_like(acc_ref)

    # Per-tile pad mask: global time index = k * Tt + local index.
    t_idx = k * tt + lax.broadcasted_iota(jnp.int32, (bt, tt), 1)     # (Bt, Tt)
    mask = (t_idx < len_ref[...]).astype(jnp.float32)                 # (Bt, Tt)

    x = x_ref[...].astype(jnp.float32)        # in-kernel upcast (bf16-friendly HBM)
    acc_ref[...] += jnp.sum(x * mask[:, :, None], axis=1)             # (Bt, H)

    @pl.when(k == pl.num_programs(1) - 1)
    def _finalize():
        pooled = acc_ref[...]                                          # (Bt, H) f32
        # Linear(H, 1): VPU multiply + lane reduce (MXU stays out of it).
        logit = jnp.sum(pooled * w_ref[...], axis=-1, keepdims=True) + b_ref[...]
        prob = jax.nn.sigmoid(logit)                                   # (Bt, 1)
        o_ref[...] = jnp.transpose(prob)                               # (1, Bt) lane-dense


def _choose_tiles(B, T, H, itemsize, block_b=None, block_t=None):
    # Batch tile: whole (padded) batch if small, else 128 so the lane-dense
    # output block stays a multiple of 128 lanes.
    if block_b is not None:
        bt = block_b
    elif B <= 128:
        bt = _round_up(B, 8)
    else:
        bt = 128
    b_pad = _round_up(B, bt)

    if block_t is not None:
        tt = block_t
    else:
        # ~4 MiB per x tile buffer: big enough to amortize per-step overhead,
        # small enough (x2 double-buffering) for v7x's tighter VMEM budget.
        target_bytes = 4 * 1024 * 1024
        tt = target_bytes // max(1, bt * H * itemsize)
        tt = max(8, (tt // 8) * 8)
        tt = min(tt, _round_up(T, 8))
    t_pad = _round_up(T, tt)
    return bt, b_pad, tt, t_pad


@functools.partial(jax.jit, static_argnames=("block_b", "block_t"))
def header_forward(inputs, lengths, weight, bias, *, block_b=None, block_t=None):
    """inputs: (B, T, H) float, lengths: (B,) int,
       weight: (1, H) float (PyTorch Linear layout), bias: (1,) float."""
    B, T, H = inputs.shape
    itemsize = jnp.dtype(inputs.dtype).itemsize
    bt, b_pad, tt, t_pad = _choose_tiles(B, T, H, itemsize, block_b, block_t)

    x = inputs
    if (b_pad, t_pad) != (B, T):
        # Zero padding: extra T rows are masked by lengths, extra B rows have
        # length 0 and are sliced off below.
        x = jnp.pad(x, ((0, b_pad - B), (0, t_pad - T), (0, 0)))
    lens = jnp.pad(lengths.astype(jnp.int32).reshape(B, 1), ((0, b_pad - B), (0, 0)))
    w = weight.reshape(1, H).astype(jnp.float32)
    b = bias.reshape(1, 1).astype(jnp.float32)

    grid = (b_pad // bt, t_pad // tt)

    out = pl.pallas_call(
        header_kernel,
        out_shape=jax.ShapeDtypeStruct((1, b_pad), jnp.float32),
        grid_spec=pltpu.PrefetchScalarGridSpec(
            num_scalar_prefetch=0,
            grid=grid,
            in_specs=[
                pl.BlockSpec((bt, tt, H), lambda i, k: (i, k, 0)),   # x tile
                pl.BlockSpec((bt, 1), lambda i, k: (i, 0)),          # lengths tile
                pl.BlockSpec((1, H), lambda i, k: (0, 0)),           # weight (resident)
                pl.BlockSpec((1, 1), lambda i, k: (0, 0)),           # bias (resident)
            ],
            out_specs=pl.BlockSpec((1, bt), lambda i, k: (0, i)),    # lane-dense output
            scratch_shapes=[pltpu.VMEM((bt, H), jnp.float32)],
        ),
        compiler_params=pltpu.CompilerParams(
            dimension_semantics=("parallel", "arbitrary"),
            vmem_limit_bytes=32 * 1024 * 1024,
        ),
    )(x, lens, w, b)

    # .squeeze() semantics: (B,) for B > 1, scalar for B == 1 (like PyTorch).
    return jnp.squeeze(out[0, :B])


if __name__ == "__main__":
    key = jax.random.PRNGKey(0)
    k_x, k_w, k_b, k_len = jax.random.split(key, 4)

    B, T, H = 8, 24, 32    # small shapes; T chosen so the reduction grid has >1 step

    x = jax.random.normal(k_x, (B, T, H), dtype=jnp.float32)
    lengths = jax.random.randint(k_len, (B,), minval=1, maxval=T + 1, dtype=jnp.int32)

    # deterministic nn.Linear(hidden_dim, 1) init: U(-1/sqrt(H), 1/sqrt(H))
    bound = 1.0 / (H ** 0.5)
    weight = jax.random.uniform(k_w, (1, H), minval=-bound, maxval=bound,
                                dtype=jnp.float32)
    bias = jax.random.uniform(k_b, (1,), minval=-bound, maxval=bound,
                              dtype=jnp.float32)

    # Force a multi-step T reduction to exercise the accumulator/pipeline path.
    out = header_forward(x, lengths, weight, bias, block_t=8)
    out = jax.block_until_ready(out)

    # pure-JAX reference (same math as the PyTorch module)
    mask = (jnp.arange(T)[None, :] < lengths[:, None]).astype(jnp.float32)[..., None]
    pooled = jnp.sum(x * mask, axis=1)
    ref = jnp.squeeze(jax.nn.sigmoid(pooled @ weight.T + bias))
    assert jnp.allclose(out, ref, atol=1e-5, rtol=1e-5), (out, ref)

    print("KERNEL_OK")
</pallas_src>

<mosaic_0001>
module attributes {stable_mosaic.version = 11 : i64} {
  func.func @header_kernel(%arg0: i32, %arg1: i32, %arg2: memref<8x8x32xf32, #tpu.memory_space<vmem>>, %arg3: memref<8x1xi32, #tpu.memory_space<vmem>>, %arg4: memref<1x32xf32, #tpu.memory_space<vmem>>, %arg5: memref<1x1xf32, #tpu.memory_space<vmem>>, %arg6: memref<1x8xf32, #tpu.memory_space<vmem>>, %arg7: memref<8x32xf32, #tpu.memory_space<vmem>>) attributes {dimension_semantics = [#tpu.dimension_semantics<parallel>, #tpu.dimension_semantics<arbitrary>], iteration_bounds = array<i64: 1, 3>, scalar_prefetch = 0 : i64, scratch_operands = 1 : i64, tpu.core_type = #tpu.core_type<tc>, window_params = [{transform_indices = @transform_0, window_bounds = array<i64: 8, 8, 32>}, {transform_indices = @transform_1, window_bounds = array<i64: 8, 1>}, {pipeline_mode = #tpu.pipeline_mode<synchronous>, transform_indices = @transform_2, window_bounds = array<i64: 1, 32>}, {pipeline_mode = #tpu.pipeline_mode<synchronous>, transform_indices = @transform_3, window_bounds = array<i64: 1, 1>}, {transform_indices = @transform_4, window_bounds = array<i64: 1, 8>}]} {
    %c0_i32 = arith.constant 0 : i32
    %0 = arith.cmpi eq, %arg1, %c0_i32 : i32
    %1 = arith.extui %0 : i1 to i32
    %c0_i32_0 = arith.constant 0 : i32
    %2 = arith.cmpi ne, %1, %c0_i32_0 : i32
    scf.if %2 {
      %cst_10 = arith.constant 0.000000e+00 : f32
      %23 = vector.broadcast %cst_10 : f32 to vector<8x32xf32>
      %c0_11 = arith.constant 0 : index
      %c0_12 = arith.constant 0 : index
      %24 = vector.load %arg7[%c0_11, %c0_12] : memref<8x32xf32, #tpu.memory_space<vmem>>, vector<8x32xf32>
      tpu.vector_store %arg7[%c0_11, %c0_12], %23 {strides = array<i32>} : memref<8x32xf32, #tpu.memory_space<vmem>>, vector<8x32xf32>,
    } else {
    }
    %c8_i32 = arith.constant 8 : i32
    %3 = arith.muli %arg1, %c8_i32 : i32
    %4 = tpu.iota {dimensions = array<i32: 1>} : vector<8x8xi32>
    %5 = vector.broadcast %3 : i32 to vector<8x8xi32>
    %6 = arith.addi %5, %4 : vector<8x8xi32>
    %c0 = arith.constant 0 : index
    %c0_1 = arith.constant 0 : index
    %7 = vector.load %arg3[%c0, %c0_1] : memref<8x1xi32, #tpu.memory_space<vmem>>, vector<8x1xi32>
    %8 = vector.broadcast %7 : vector<8x1xi32> to vector<8x8xi32>
    %9 = arith.cmpi slt, %6, %8 : vector<8x8xi32>
    %10 = arith.extui %9 : vector<8x8xi1> to vector<8x8xi32>
    %11 = arith.sitofp %10 : vector<8x8xi32> to vector<8x8xf32>
    %c0_2 = arith.constant 0 : index
    %c0_3 = arith.constant 0 : index
    %c0_4 = arith.constant 0 : index
    %12 = vector.load %arg2[%c0_2, %c0_3, %c0_4] : memref<8x8x32xf32, #tpu.memory_space<vmem>>, vector<8x8x32xf32>
    %c0_5 = arith.constant 0 : index
    %c0_6 = arith.constant 0 : index
    %13 = vector.load %arg7[%c0_5, %c0_6] : memref<8x32xf32, #tpu.memory_space<vmem>>, vector<8x32xf32>
    %14 = vector.shape_cast %11 : vector<8x8xf32> to vector<8x8x1xf32>
    %15 = vector.broadcast %14 : vector<8x8x1xf32> to vector<8x8x32xf32>
    %16 = arith.mulf %12, %15 : vector<8x8x32xf32>
    %cst = arith.constant dense<0.000000e+00> : vector<8x32xf32>
    %17 = vector.multi_reduction <add>, %16, %cst [1] : vector<8x8x32xf32> to vector<8x32xf32>
    %18 = arith.addf %13, %17 : vector<8x32xf32>
    %c0_7 = arith.constant 0 : index
    %c0_8 = arith.constant 0 : index
    %19 = vector.load %arg7[%c0_7, %c0_8] : memref<8x32xf32, #tpu.memory_space<vmem>>, vector<8x32xf32>
    tpu.vector_store %arg7[%c0_7, %c0_8], %18 {strides = array<i32>} : memref<8x32xf32, #tpu.memory_space<vmem>>, vector<8x32xf32>,
    %c2_i32 = arith.constant 2 : i32
    %20 = arith.cmpi eq, %arg1, %c2_i32 : i32
    %21 = arith.extui %20 : i1 to i32
    %c0_i32_9 = arith.constant 0 : i32
    %22 = arith.cmpi ne, %21, %c0_i32_9 : i32
    scf.if %22 {
      %c0_10 = arith.constant 0 : index
      %c0_11 = arith.constant 0 : index
      %23 = vector.load %arg7[%c0_10, %c0_11] : memref<8x32xf32, #tpu.memory_space<vmem>>, vector<8x32xf32>
      %c0_12 = arith.constant 0 : index
      %c0_13 = arith.constant 0 : index
      %24 = vector.load %arg4[%c0_12, %c0_13] : memref<1x32xf32, #tpu.memory_space<vmem>>, vector<1x32xf32>
      %25 = vector.broadcast %24 : vector<1x32xf32> to vector<8x32xf32>
      %26 = arith.mulf %23, %25 : vector<8x32xf32>
      %cst_14 = arith.constant dense<0.000000e+00> : vector<8xf32>
      %27 = vector.multi_reduction <add>, %26, %cst_14 [1] : vector<8x32xf32> to vector<8xf32>
      %28 = vector.shape_cast %27 : vector<8xf32> to vector<8x1xf32>
      %c0_15 = arith.constant 0 : index
      %c0_16 = arith.constant 0 : index
      %29 = vector.load %arg5[%c0_15, %c0_16] : memref<1x1xf32, #tpu.memory_space<vmem>>, vector<1x1xf32>
      %30 = vector.broadcast %29 : vector<1x1xf32> to vector<8x1xf32>
      %31 = arith.addf %28, %30 : vector<8x1xf32>
      %32 = arith.negf %31 : vector<8x1xf32>
      %33 = math.exp %32 : vector<8x1xf32>
      %cst_17 = arith.constant 1.000000e+00 : f32
      %34 = vector.broadcast %cst_17 : f32 to vector<8x1xf32>
      %35 = arith.addf %34, %33 : vector<8x1xf32>
      %36 = arith.divf %34, %35 : vector<8x1xf32>
      %37 = tpu.transpose %36, [1, 0] : vector<8x1xf32> -> vector<1x8xf32>
      %c0_18 = arith.constant 0 : index
      %c0_19 = arith.constant 0 : index
      %38 = vector.load %arg6[%c0_18, %c0_19] : memref<1x8xf32, #tpu.memory_space<vmem>>, vector<1x8xf32>
      tpu.vector_store %arg6[%c0_18, %c0_19], %37 {strides = array<i32>} : memref<1x8xf32, #tpu.memory_space<vmem>>, vector<1x8xf32>,
    } else {
    }
    return
  }
  func.func @transform_0(%arg0: i32, %arg1: i32) -> (i32, i32, i32) {
    %c0_i32 = arith.constant 0 : i32
    %c0_i32_0 = arith.constant 0 : i32
    return %arg0, %arg1, %c0_i32 : i32, i32, i32
  }
  func.func @transform_1(%arg0: i32, %arg1: i32) -> (i32, i32) {
    %c0_i32 = arith.constant 0 : i32
    %c0_i32_0 = arith.constant 0 : i32
    return %arg0, %c0_i32 : i32, i32
  }
  func.func @transform_2(%arg0: i32, %arg1: i32) -> (i32, i32) {
    %c0_i32 = arith.constant 0 : i32
    %c0_i32_0 = arith.constant 0 : i32
    %c0_i32_1 = arith.constant 0 : i32
    return %c0_i32, %c0_i32_0 : i32, i32
  }
  func.func @transform_3(%arg0: i32, %arg1: i32) -> (i32, i32) {
    %c0_i32 = arith.constant 0 : i32
    %c0_i32_0 = arith.constant 0 : i32
    %c0_i32_1 = arith.constant 0 : i32
    return %c0_i32, %c0_i32_0 : i32, i32
  }
  func.func @transform_4(%arg0: i32, %arg1: i32) -> (i32, i32) {
    %c0_i32 = arith.constant 0 : i32
    %c0_i32_0 = arith.constant 0 : i32
    return %c0_i32, %arg0 : i32, i32
  }
}

</mosaic_0001>

<llo_original>
// kernel: header_forward.1
$region0: #{header_forward.1}
  #allocation0 [shape = 'u32[]', space=smem, size = 0x4, offset = 0x4, fixed_abs, tag = 'smem constant byte address 0x4 - core index']
  #allocation1 [shape = 'u32[144,128]{1,0:T(1,128)}', space=vmem, size = 0x12000, scoped, tag = 'internal scratch']
  #allocation2 [shape = 'f32[8,32]{1,0:T(8,128)}', space=vmem, size = 0x1000, scoped, tag = 'scratch operand']
  #allocation3 [shape = 'f32[1,1]{1,0:T(1,128)S(1)}', space=vmem, size = 0x200, scoped, tag = 'scoped memory for header_forward.1']
  %s0 = inlined_call_operand.hbm [shape: f32[8,24,32], index: 0, kind: input, shape index: {}]
  %s1 = inlined_call_operand.vmem [shape: s32[8,1], index: 1, kind: input, shape index: {}]
  %s2 = inlined_call_operand.vmem [shape: f32[1,32], index: 2, kind: input, shape index: {}]
  %s3 = inlined_call_operand.<no memory space> [shape: f32[1,1], index: 3, kind: input, shape index: {}]
  %s4 = inlined_call_operand.hbm [shape: f32[1,8], index: 4, kind: output, shape index: {}]
  %s5 = sld [smem:[#allocation0]]
  $region61: #{header_forward.1} parent=0
    _
  %s7 = ssub.s32 1, %s5
  %s8 = scalar_select 0, %s7, %s5
  %v9 = vstv %s3
  %10 = vst [vmem:[#allocation3] sm:$0x1] %v9
  $region1: #{header_forward.1} parent=0
    #allocation4 [shape = 'u8[65536]{0}', space=vmem, size = 0x10000, scoped, tag = 'input window, operand 0']
    #allocation5 [shape = 's32[2]{0}', space=sflag, size = 0x8, scoped, tag = 'scoped memory for header_forward.1']
    #allocation6 [shape = 's32[2]{0}', space=sflag, size = 0x8, scoped, tag = 'scoped memory for header_forward.1']
    #allocation7 [shape = 'u8[512]{0}', space=vmem, size = 0x400, scoped, tag = 'output window, operand 0, single buffered']
    %11 = vsyncpa [#allocation5], 0
    %s12 = scalar_lea.sflag [#allocation5], 1
    %13 = vsyncpa %s12, 0
    %14 = vsyncpa [#allocation6], 0
    loop: start=0, step=1, limit=5
    $region2: #{header_forward.1} parent=1 // loop_pre_header
      _
    $region3: #{header_forward.1} parent=1 // loop_header
      %s16 = sphi 0, %s20
      %p17 = scmp.ge.s32.totalorder %s16, 5
      %s23 = sphi 0, %s35
      %s24 = sphi 0, %s31
      %s25 = sphi 0, %s23
      %s26 = sphi 0, %s24
      %s27 = sphi 0, %s25
      %s28 = sphi 0, %s26
      %s40 = sphi 0, %s42
      %s43 = sphi 0, %s40
      %s44 = sphi 0, %s43
      %s60 = sphi 0, %s44
      %s66 = sphi 0, %s68
      %s69 = sphi 0, %s66
      %s70 = sphi 0, %s69
      %s86 = sphi 0, %s70
      %s90 = sphi 0, %s90
      %s92 = sphi 0, %s90
      %s93 = sphi 0, %s92
      %s107 = sphi 0, %s93
      %s111 = sphi 0, %s111
      %s113 = sphi 0, %s111
      %s114 = sphi 0, %s113
      %s128 = sphi 0, %s114
      %s134 = sphi 0, %s136
      %s137 = sphi 0, %s134
      %s138 = sphi 0, %s137
      %s154 = sphi 0, %s138
    $region4: #{header_forward.1} parent=1 // loop_header_branch
      %19 = sbr.rel (%p17) target = $region8
    $region5: #{header_forward.1} parent=1 // loop_body
      %s21 = ssub.s32 %s16, 1
      %s22 = ssub.s32 %s16, 2
      %s29 = sadd.s32 1, %s24
      %p30 = scmp.ge.s32.totalorder %s29, 3
      %s31 = scalar_select %p30, 0, %s29
      %s32 = sadd.s32 1, %s23
      %s33 = scalar_select %p30, %s32, %s23
      %p34 = scmp.ge.s32.totalorder %s33, 1
      %s35 = scalar_select %p34, 0, %s33
      %s36 = ssub.s32 %s23, %s35
      %s37 = ssub.s32 %s24, %s31
      %s38 = sor.u32 %s36, %s37
      %p39 = scmp.eq.s32.totalorder %s38, 0
      %s41 = sadd.s32 %s40, 1
      %s42 = scalar_select %p39, %s40, %s41
      %p45 = pneg %p39
      %p46 = scmp.eq.s32.totalorder %s16, 2
      %p47 = por %p45, %p46
      %p48 = scmp.ne.s32.totalorder %s40, %s43
      %p49 = scmp.eq.s32.totalorder %s16, 0
      %p50 = por %p48, %p49
      %p51 = scmp.ne.s32.totalorder %s40, %s43
      %p52 = scmp.eq.s32.totalorder %s21, 2
      %p53 = por %p51, %p52
      %p54 = scmp.ne.s32.totalorder %s43, %s44
      %p55 = scmp.eq.s32.totalorder %s21, 0
      %p56 = por %p54, %p55
      %p57 = scmp.ne.s32.totalorder %s43, %s44
      %p58 = scmp.eq.s32.totalorder %s22, 2
      %p59 = por %p57, %p58
      %p61 = scmp.ne.s32.totalorder %s44, %s60
      %p62 = scmp.eq.s32.totalorder %s22, 0
      %p63 = por %p61, %p62
      %s64 = ssub.s32 %s23, %s35
      %p65 = scmp.eq.s32.totalorder %s64, 0
      %s67 = sadd.s32 %s66, 1
      %s68 = scalar_select %p65, %s66, %s67
      %p71 = pneg %p65
      %p72 = scmp.eq.s32.totalorder %s16, 2
      %p73 = por %p71, %p72
      %p74 = scmp.ne.s32.totalorder %s66, %s69
      %p75 = scmp.eq.s32.totalorder %s16, 0
      %p76 = por %p74, %p75
      %p77 = scmp.ne.s32.totalorder %s66, %s69
      %p78 = scmp.eq.s32.totalorder %s21, 2
      %p79 = por %p77, %p78
      %p80 = scmp.ne.s32.totalorder %s69, %s70
      %p81 = scmp.eq.s32.totalorder %s21, 0
      %p82 = por %p80, %p81
      %p83 = scmp.ne.s32.totalorder %s69, %s70
      %p84 = scmp.eq.s32.totalorder %s22, 2
      %p85 = por %p83, %p84
      %p87 = scmp.ne.s32.totalorder %s70, %s86
      %p88 = scmp.eq.s32.totalorder %s22, 0
      %p89 = por %p87, %p88
      %s91 = sadd.s32 %s90, 1
      %p94 = scmp.eq.s32.totalorder %s16, 2
      %p95 = scmp.ne.s32.totalorder %s90, %s92
      %p96 = scmp.eq.s32.totalorder %s16, 0
      %p97 = por %p95, %p96
      %p98 = scmp.ne.s32.totalorder %s90, %s92
      %p99 = scmp.eq.s32.totalorder %s21, 2
      %p100 = por %p98, %p99
      %p101 = scmp.ne.s32.totalorder %s92, %s93
      %p102 = scmp.eq.s32.totalorder %s21, 0
      %p103 = por %p101, %p102
      %p104 = scmp.ne.s32.totalorder %s92, %s93
      %p105 = scmp.eq.s32.totalorder %s22, 2
      %p106 = por %p104, %p105
      %p108 = scmp.ne.s32.totalorder %s93, %s107
      %p109 = scmp.eq.s32.totalorder %s22, 0
      %p110 = por %p108, %p109
      %s112 = sadd.s32 %s111, 1
      %p115 = scmp.eq.s32.totalorder %s16, 2
      %p116 = scmp.ne.s32.totalorder %s111, %s113
      %p117 = scmp.eq.s32.totalorder %s16, 0
      %p118 = por %p116, %p117
      %p119 = scmp.ne.s32.totalorder %s111, %s113
      %p120 = scmp.eq.s32.totalorder %s21, 2
      %p121 = por %p119, %p120
      %p122 = scmp.ne.s32.totalorder %s113, %s114
      %p123 = scmp.eq.s32.totalorder %s21, 0
      %p124 = por %p122, %p123
      %p125 = scmp.ne.s32.totalorder %s113, %s114
      %p126 = scmp.eq.s32.totalorder %s22, 2
      %p127 = por %p125, %p126
      %p129 = scmp.ne.s32.totalorder %s114, %s128
      %p130 = scmp.eq.s32.totalorder %s22, 0
      %p131 = por %p129, %p130
      %s132 = ssub.s32 %s23, %s35
      %p133 = scmp.eq.s32.totalorder %s132, 0
      %s135 = sadd.s32 %s134, 1
      %s136 = scalar_select %p133, %s134, %s135
      %p139 = pneg %p133
      %p140 = scmp.eq.s32.totalorder %s16, 2
      %p141 = por %p139, %p140
      %p142 = scmp.ne.s32.totalorder %s134, %s137
      %p143 = scmp.eq.s32.totalorder %s16, 0
      %p144 = por %p142, %p143
      %p145 = scmp.ne.s32.totalorder %s134, %s137
      %p146 = scmp.eq.s32.totalorder %s21, 2
      %p147 = por %p145, %p146
      %p148 = scmp.ne.s32.totalorder %s137, %s138
      %p149 = scmp.eq.s32.totalorder %s21, 0
      %p150 = por %p148, %p149
      %p151 = scmp.ne.s32.totalorder %s137, %s138
      %p152 = scmp.eq.s32.totalorder %s22, 2
      %p153 = por %p151, %p152
      %p155 = scmp.ne.s32.totalorder %s138, %s154
      %p156 = scmp.eq.s32.totalorder %s22, 0
      %p157 = por %p155, %p156
      %p158 = scmp.le.s32.totalorder 1, %s16
      %p159 = scmp.lt.s32.totalorder %s16, 4
      %p160 = pnand %p158, %p159
      %p161 = pneg %p160
      // Predicated region
      $region9: #{header_forward.1} parent=5 // pred_check
        _
      $region10: #{header_forward.1} parent=5 // pred_check_branch
        %163 = sbr.rel (%p160) target = $region12
      $region11: #{header_forward.1} parent=5 // pred_region
        %s164 = ssub.s32 %s16, 1
        // Predicated region
        $region13: #{header_forward.1} parent=11 // pred_check
          %p165 = pneg %p82
        $region14: #{header_forward.1} parent=11 // pred_check_branch
          %167 = sbr.rel (%p165) target = $region16
        $region15: #{header_forward.1} parent=11 // pred_region
          %p168 = scmp.lt.s32.totalorder %s25, 0
          %s169 = scalar_select %p168, %s25, 0
          %s170 = smul.addr %s169, 8
          %s171 = scalar_lea.vmem %s1, %s170
        $region16: #{header_forward.1} parent=11 // pred_fallthru
          _
        // Predicated region
        $region17: #{header_forward.1} parent=11 // pred_check
          %p172 = pneg %p103
        $region18: #{header_forward.1} parent=11 // pred_check_branch
          %174 = sbr.rel (%p172) target = $region20
        $region19: #{header_forward.1} parent=11 // pred_region
          _
        $region20: #{header_forward.1} parent=11 // pred_fallthru
          _
        // Predicated region
        $region21: #{header_forward.1} parent=11 // pred_check
          %p175 = pneg %p124
        $region22: #{header_forward.1} parent=11 // pred_check_branch
          %177 = sbr.rel (%p175) target = $region24
        $region23: #{header_forward.1} parent=11 // pred_region
          _
        $region24: #{header_forward.1} parent=11 // pred_fallthru
          _
      $region12: #{header_forward.1} parent=5 // pred_fallthru
        _
      %p178 = scmp.lt.s32.totalorder %s16, 3
      // Predicated region
      $region25: #{header_forward.1} parent=5 // pred_check
        %p179 = pneg %p178
      $region26: #{header_forward.1} parent=5 // pred_check_branch
        %181 = sbr.rel (%p179) target = $region28
      $region27: #{header_forward.1} parent=5 // pred_region
        // Predicated region
        $region29: #{header_forward.1} parent=27 // pred_check
          %p182 = pneg %p50
        $region30: #{header_forward.1} parent=27 // pred_check_branch
          %184 = sbr.rel (%p182) target = $region32
        $region31: #{header_forward.1} parent=27 // pred_region
          %s185 = sand.u32 %s40, 1
          %s186 = scalar_lea.sflag [#allocation5], %s185
          %s187 = sand.u32 %s40, 1
          %s188 = smul.addr %s187, 64
          %s189 = scalar_lea.vmem [#allocation4], %s188
          %s190 = smul.u32 8, %s23
          %s192 = ssub.s32 1024, 1024
          %193 = vsyncadd %s186, %s192
          %s194 = smul.addr %s190, 3
          %s195 = sadd.s32 %s24, %s194
          %s196 = smul.addr %s195, 128
          %s197 = scalar_lea.hbm %s0, %s196
          %s198 = sshll.u32 %s189, 4
          %s199 = int_to_ptr.vmem [resolvable:$true] %s198
          %204 = dma.hbm_to_vmem [thread:$0]  %s197, 1024, %s199, %s186, 384, 128, 8
        $region32: #{header_forward.1} parent=27 // pred_fallthru
          _
      $region28: #{header_forward.1} parent=5 // pred_fallthru
        _
      %p205 = scmp.le.s32.totalorder 1, %s16
      %p206 = scmp.lt.s32.totalorder %s16, 4
      %p207 = pnand %p205, %p206
      %p208 = pneg %p207
      // Predicated region
      $region33: #{header_forward.1} parent=5 // pred_check
        _
      $region34: #{header_forward.1} parent=5 // pred_check_branch
        %210 = sbr.rel (%p207) target = $region36
      $region35: #{header_forward.1} parent=5 // pred_region
        %s211 = ssub.s32 %s16, 1
        %s212 = sand.u32 %s43, 1
        %s213 = scalar_lea.sflag [#allocation5], %s212
        %s214 = sand.u32 %s43, 1
        %s215 = smul.addr %s214, 64
        %s216 = scalar_lea.vmem [#allocation4], %s215
        // Predicated region
        $region37: #{header_forward.1} parent=35 // pred_check
          %p217 = pneg %p56
        $region38: #{header_forward.1} parent=35 // pred_check_branch
          %219 = sbr.rel (%p217) target = $region40
        $region39: #{header_forward.1} parent=35 // pred_region
          %220 = dma.done %s213, 1024
        $region40: #{header_forward.1} parent=35 // pred_fallthru
          _
        %s221 = sand.u32 %s43, 1
        %s222 = scalar_lea.sflag [#allocation5], %s221
        %s223 = sand.u32 %s43, 1
        %s224 = smul.addr %s223, 64
        %s225 = scalar_lea.vmem [#allocation4], %s224
        %p226 = pneg %p56
        %p227 = pneg %p53
        %p228 = scmp.lt.s32.totalorder %s25, 0
        %s229 = scalar_select %p228, %s25, 0
        %s230 = smul.addr %s229, 8
        %s231 = scalar_lea.vmem %s1, %s230
        %p232 = pneg %p82
        %p233 = pneg %p79
        %p234 = pneg %p103
        %p235 = pneg %p100
        %p236 = pneg %p124
        %p237 = pneg %p121
        %p238 = pneg %p150
        %p239 = pneg %p147
        %s240 = smul.u32 8, %s25
        %p241 = scmp.lt.s32.totalorder %s25, 0
        %s242 = scalar_select %p241, %s25, 0
        %s243 = smul.addr %s242, 8
        %s244 = scalar_lea.vmem %s1, %s243
        %p245 = scmp.eq.s32.totalorder %s26, 0
        // Predicated region
        $region41: #{header_forward.1} parent=35 // pred_check
          %p246 = pneg %p245
        $region42: #{header_forward.1} parent=35 // pred_check_branch
          %248 = sbr.rel (%p246) target = $region44
        $region43: #{header_forward.1} parent=35 // pred_region
          %vm249 = vcmask 261120
          %250 = vst.msk [vmem:[#allocation2] sm:$0xff] %vm249, 0.0
        $region44: #{header_forward.1} parent=35 // pred_fallthru
          _
        %s251 = smul.u32 %s26, 8
        %v252 = vlaneseq
        %v253 = vand.u32 %v252, 127
        %v254 = vstv %s251
        %v255 = vadd.s32 %v254, %v253
        %v256 = vld [vmem:[%s244] sm:$0xff]
        %257 = vset.pattern.permute.xlu0 0
        %258 = vperm.xlu0 %257, %v256
        %v259 = vpop.permute.xlu0 %258
        %vm260 = vcmp.lt.s32.totalorder %v255, %v259
        %v261 = vsel %vm260, 1, 0
        %v262 = vcvt.s32.f32 %v261
        %v263 = vld [vmem:[%s216] sm:$0xff]
        %v264 = vld [vmem:[%s216 + $0x8] sm:$0xff]
        %v265 = vld [vmem:[%s216 + $0x10] sm:$0xff]
        %v266 = vld [vmem:[%s216 + $0x18] sm:$0xff]
        %v267 = vld [vmem:[%s216 + $0x20] sm:$0xff]
        %v268 = vld [vmem:[%s216 + $0x28] sm:$0xff]
        %v269 = vld [vmem:[%s216 + $0x30] sm:$0xff]
        %v270 = vld [vmem:[%s216 + $0x38] sm:$0xff]
        %v271 = vld [vmem:[#allocation2] sm:$0xff]
        %v272 = vlaneseq
        %v273 = vshrl.u32 %v272, 7
        %v274 = vsub.s32 0, %v273
        %v275 = vrot.slane %v262, %v274
        %277 = vbcast.lane.b32.xlu0 %v275, 256
        %v278 = vpop.permute.xlu0 %277
        %v279 = vlaneseq
        %v280 = vshrl.u32 %v279, 7
        %v281 = vsub.s32 1, %v280
        %v282 = vrot.slane %v262, %v281
        %284 = vbcast.lane.b32.xlu0 %v282, 256
        %v285 = vpop.permute.xlu0 %284
        %v286 = vlaneseq
        %v287 = vshrl.u32 %v286, 7
        %v288 = vsub.s32 2, %v287
        %v289 = vrot.slane %v262, %v288
        %291 = vbcast.lane.b32.xlu0 %v289, 256
        %v292 = vpop.permute.xlu0 %291
        %v293 = vlaneseq
        %v294 = vshrl.u32 %v293, 7
        %v295 = vsub.s32 3, %v294
        %v296 = vrot.slane %v262, %v295
        %298 = vbcast.lane.b32.xlu0 %v296, 256
        %v299 = vpop.permute.xlu0 %298
        %v300 = vlaneseq
        %v301 = vshrl.u32 %v300, 7
        %v302 = vsub.s32 4, %v301
        %v303 = vrot.slane %v262, %v302
        %305 = vbcast.lane.b32.xlu0 %v303, 256
        %v306 = vpop.permute.xlu0 %305
        %v307 = vlaneseq
        %v308 = vshrl.u32 %v307, 7
        %v309 = vsub.s32 5, %v308
        %v310 = vrot.slane %v262, %v309
        %312 = vbcast.lane.b32.xlu0 %v310, 256
        %v313 = vpop.permute.xlu0 %312
        %v314 = vlaneseq
        %v315 = vshrl.u32 %v314, 7
        %v316 = vsub.s32 6, %v315
        %v317 = vrot.slane %v262, %v316
        %319 = vbcast.lane.b32.xlu0 %v317, 256
        %v320 = vpop.permute.xlu0 %319
        %v321 = vlaneseq
        %v322 = vshrl.u32 %v321, 7
        %v323 = vsub.s32 7, %v322
        %v324 = vrot.slane %v262, %v323
        %326 = vbcast.lane.b32.xlu0 %v324, 256
        %v327 = vpop.permute.xlu0 %326
        %v328 = vmul.f32 %v263, %v278
        %v329 = vmul.f32 %v264, %v285
        %v330 = vmul.f32 %v265, %v292
        %v331 = vmul.f32 %v266, %v299
        %v332 = vmul.f32 %v267, %v306
        %v333 = vmul.f32 %v268, %v313
        %v334 = vmul.f32 %v269, %v320
        %v335 = vmul.f32 %v270, %v327
        %vm336 = vcmask 261120
        %v337 = vsel %vm336, %v328, 0.0
        %v338 = vrot.slane %v337, 4
        %v339 = vadd.f32 %v337, %v338
        %v340 = vrot.slane %v339, 2
        %v341 = vadd.f32 %v339, %v340
        %v342 = vrot.slane %v341, 1
        %v343 = vadd.f32 %v341, %v342
        %v344 = vsel %vm336, %v329, 0.0
        %v345 = vrot.slane %v344, 4
        %v346 = vadd.f32 %v344, %v345
        %v347 = vrot.slane %v346, 2
        %v348 = vadd.f32 %v346, %v347
        %v349 = vrot.slane %v348, 1
        %v350 = vadd.f32 %v348, %v349
        %v351 = vsel %vm336, %v330, 0.0
        %v352 = vrot.slane %v351, 4
        %v353 = vadd.f32 %v351, %v352
        %v354 = vrot.slane %v353, 2
        %v355 = vadd.f32 %v353, %v354
        %v356 = vrot.slane %v355, 1
        %v357 = vadd.f32 %v355, %v356
        %v358 = vsel %vm336, %v331, 0.0
        %v359 = vrot.slane %v358, 4
        %v360 = vadd.f32 %v358, %v359
        %v361 = vrot.slane %v360, 2
        %v362 = vadd.f32 %v360, %v361
        %v363 = vrot.slane %v362, 1
        %v364 = vadd.f32 %v362, %v363
        %v365 = vsel %vm336, %v332, 0.0
        %v366 = vrot.slane %v365, 4
        %v367 = vadd.f32 %v365, %v366
        %v368 = vrot.slane %v367, 2
        %v369 = vadd.f32 %v367, %v368
        %v370 = vrot.slane %v369, 1
        %v371 = vadd.f32 %v369, %v370
        %v372 = vsel %vm336, %v333, 0.0
        %v373 = vrot.slane %v372, 4
        %v374 = vadd.f32 %v372, %v373
        %v375 = vrot.slane %v374, 2
        %v376 = vadd.f32 %v374, %v375
        %v377 = vrot.slane %v376, 1
        %v378 = vadd.f32 %v376, %v377
        %v379 = vsel %vm336, %v334, 0.0
        %v380 = vrot.slane %v379, 4
        %v381 = vadd.f32 %v379, %v380
        %v382 = vrot.slane %v381, 2
        %v383 = vadd.f32 %v381, %v382
        %v384 = vrot.slane %v383, 1
        %v385 = vadd.f32 %v383, %v384
        %v386 = vsel %vm336, %v335, 0.0
        %v387 = vrot.slane %v386, 4
        %v388 = vadd.f32 %v386, %v387
        %v389 = vrot.slane %v388, 2
        %v390 = vadd.f32 %v388, %v389
        %v391 = vrot.slane %v390, 1
        %v392 = vadd.f32 %v390, %v391
        %vm401 = vcmask 1041409
        %v402 = vsel %vm401, %v350, %v343
        %vm403 = vcmask 1042434
        %v404 = vsel %vm403, %v357, %v402
        %vm405 = vcmask 1043459
        %v406 = vsel %vm405, %v364, %v404
        %vm407 = vcmask 1044484
        %v408 = vsel %vm407, %v371, %v406
        %vm409 = vcmask 1045509
        %v410 = vsel %vm409, %v378, %v408
        %vm411 = vcmask 1046534
        %v412 = vsel %vm411, %v385, %v410
        %vm413 = vcmask 1047559
        %v414 = vsel %vm413, %v392, %v412
        %v416 = vadd.f32 %v271, %v414
        %417 = vst.msk [vmem:[#allocation2] sm:$0xff] %vm336, %v416
        %p418 = scmp.eq.s32.totalorder %s26, 2
        // Predicated region
        $region45: #{header_forward.1} parent=35 // pred_check
          %p419 = pneg %p418
        $region46: #{header_forward.1} parent=35 // pred_check_branch
          %421 = sbr.rel (%p419) target = $region48
        $region47: #{header_forward.1} parent=35 // pred_region
          %v422 = vld [vmem:[#allocation2] sm:$0xff]
          %v423 = vld [vmem:[%s2] sm:$0x1]
          %v425 = vlaneseq
          %v426 = vshrl.u32 %v425, 7
          %v427 = vsub.s32 0, %v426
          %v428 = vrot.slane %v423, %v427
          %v430 = vmul.f32 %v422, %v428
          %v431 = vsel %vm336, %v430, 0.0
          %432 = vadd.xlane.f32.xlu0 %v431
          %v433 = vpop.xlane.xlu0 %432
          %v434 = vld [vmem:[#allocation3] sm:$0x1]
          %v436 = vlaneseq
          %v437 = vshrl.u32 %v436, 7
          %v438 = vsub.s32 0, %v437
          %v439 = vrot.slane %v434, %v438
          %v441 = vadd.f32 %v433, %v439
          %v442 = vxor.u32 %v441, 2147483648
          %v443 = vmul.f32 %v442, 1.442695
          %v444 = vpow.pop %v443
          %v445 = vadd.f32 %v444, 1.0
          %v446 = vrcp.pop %v445
          %v447 = vmul.f32 1.0, %v446
          %448 = vxpose.xlu0.b32.start [1/16] %v447, 128
          %449 = vxpose.xlu0.b32.cont [2/16] 0.0, 128
          %450 = vxpose.xlu0.b32.cont [3/16] 0.0, 128
          %451 = vxpose.xlu0.b32.cont [4/16] 0.0, 128
          %452 = vxpose.xlu0.b32.cont [5/16] 0.0, 128
          %453 = vxpose.xlu0.b32.cont [6/16] 0.0, 128
          %454 = vxpose.xlu0.b32.cont [7/16] 0.0, 128
          %455 = vxpose.xlu0.b32.cont [8/16] 0.0, 128
          %456 = vxpose.xlu0.b32.cont [9/16] 0.0, 128
          %457 = vxpose.xlu0.b32.cont [10/16] 0.0, 128
          %458 = vxpose.xlu0.b32.cont [11/16] 0.0, 128
          %459 = vxpose.xlu0.b32.cont [12/16] 0.0, 128
          %460 = vxpose.xlu0.b32.cont [13/16] 0.0, 128
          %461 = vxpose.xlu0.b32.cont [14/16] 0.0, 128
          %462 = vxpose.xlu0.b32.cont [15/16] 0.0, 128
          %463 = vxpose.xlu0.b32.end [16/16] 0.0, 128
          %v464 = vpop.trf.xlu0
          %v465 = vpop.trf.xlu0
          %v466 = vpop.trf.xlu0
          %v467 = vpop.trf.xlu0
          %v468 = vpop.trf.xlu0
          %v469 = vpop.trf.xlu0
          %v470 = vpop.trf.xlu0
          %v471 = vpop.trf.xlu0
          %v472 = vpop.trf.xlu0
          %v473 = vpop.trf.xlu0
          %v474 = vpop.trf.xlu0
          %v475 = vpop.trf.xlu0
          %v476 = vpop.trf.xlu0
          %v477 = vpop.trf.xlu0
          %v478 = vpop.trf.xlu0
          %v479 = vpop.trf.xlu0
          %vm480 = vcmask 57344
          %481 = vst.msk [vmem:[#allocation7] sm:$0x1] %vm480, %v464
        $region48: #{header_forward.1} parent=35 // pred_fallthru
          _
        // Predicated region
        $region49: #{header_forward.1} parent=35 // pred_check
          %p482 = pneg %p147
        $region50: #{header_forward.1} parent=35 // pred_check_branch
          %484 = sbr.rel (%p482) target = $region52
        $region51: #{header_forward.1} parent=35 // pred_region
          %s486 = ssub.s32 16, 16
          %487 = vsyncadd [#allocation6], %s486
          %s488 = smul.addr %s25, 16
          %s489 = scalar_lea.hbm %s4, %s488
          %s491 = sshll.u32 [#allocation7], 4
          %s492 = int_to_ptr.vmem [resolvable:$true] %s491
          %494 = dma.vmem_to_hbm [thread:$0]  %s492, 16, %s489, [#allocation6]
        $region52: #{header_forward.1} parent=35 // pred_fallthru
          _
        // Predicated region
        $region53: #{header_forward.1} parent=35 // pred_check
          %p495 = pneg %p147
        $region54: #{header_forward.1} parent=35 // pred_check_branch
          %497 = sbr.rel (%p495) target = $region56
        $region55: #{header_forward.1} parent=35 // pred_region
          %498 = dma.done [#allocation6], 16
        $region56: #{header_forward.1} parent=35 // pred_fallthru
          _
      $region36: #{header_forward.1} parent=5 // pred_fallthru
        _
      %p499 = scmp.le.s32.totalorder 2, %s16
      // Predicated region
      $region57: #{header_forward.1} parent=5 // pred_check
        %p500 = pneg %p499
      $region58: #{header_forward.1} parent=5 // pred_check_branch
        %502 = sbr.rel (%p500) target = $region60
      $region59: #{header_forward.1} parent=5 // pred_region
        %s503 = ssub.s32 %s16, 2
      $region60: #{header_forward.1} parent=5 // pred_fallthru
        _
    $region6: #{header_forward.1} parent=1 // loop_footer
      %s20 = sadd.s32 1, %s16
    $region7: #{header_forward.1} parent=1 // loop_footer_branch
      %15 = sbr.rel target = $region3
    $region8: #{header_forward.1} parent=1 // loop_exit
      _
    %504 = vsyncpa [#allocation5], 1
    %s505 = scalar_lea.sflag [#allocation5], 1
    %506 = vsyncpa %s505, 1
    %507 = vsyncpa [#allocation6], 1
    %s508 = scalar_lea.sflag [#allocation6], 1
    %509 = vsyncpa %s508, 1

</llo_original>
